<compile_context>
chip_gen: v6e
topology: v6e:2x2x1
jax: 0.10.0
libtpu: 0.0.40
codegen_flags: <defaults>
</compile_context>

<pallas_src>
import jax
import jax.numpy as jnp
from jax import lax
from jax.experimental import pallas as pl
from jax.experimental.pallas import tpu as pltpu


def decoder_block_kernel(x_ref, w_ref, bias_ref, o_ref):
    # x_ref:    (1, H+2, W, 3*Cin) bf16  row-padded, kw-packed NHWC image
    # w_ref:    (3, 3*Cin, TCO)    bf16  BN-scale-folded conv weights (1 Cout tile)
    # bias_ref: (1, TCO)           f32   folded-BN bias
    # o_ref:    (1, TH*W, TCO)     bf16  conv+BN+ReLU rows for this tile
    W = x_ref.shape[2]
    K = x_ref.shape[3]               # 3 * Cin
    TCO = o_ref.shape[2]
    TH = o_ref.shape[1] // W

    row0 = pl.program_id(2) * TH     # first output row handled by this grid step

    # 3x3 conv as 3 MXU matmuls (kw folded into the contraction dim), f32 acc.
    # The kh slices are along the untiled H axis -> aligned, no relayout copies.
    acc = jnp.zeros((TH * W, TCO), jnp.float32)
    for kh in range(3):
        win = x_ref[0, pl.ds(row0 + kh, TH), :, :]          # (TH, W, 3*Cin)
        acc = acc + jnp.dot(win.reshape(TH * W, K), w_ref[kh],
                            preferred_element_type=jnp.float32)

    # Folded-BN bias + ReLU once after the full accumulation; bf16 store.
    o_ref[0] = jnp.maximum(acc + bias_ref[...], 0.0).astype(o_ref.dtype)


def _tpu_generation():
    try:
        kind = jax.devices()[0].device_kind.lower()
    except Exception:
        return 6
    for g in (7, 6, 5, 4):
        if "v%d" % g in kind:
            return g
    return 6


def _pick_row_tile(H, W, tco, budget_bytes):
    """Largest divisor TH of H whose f32 accumulator tile fits the budget and
    keeps the output block sublane-aligned; never errors on an empty list."""
    legal = [t for t in range(1, H + 1) if H % t == 0 and (t * W) % 8 == 0]
    if not legal:
        legal = [H]                              # full-extent block always legal
    fits = [t for t in legal if t * W * tco * 4 <= budget_bytes]
    return max(fits) if fits else min(legal)


def decoder_block_forward(x_nchw, weight_oihw, gamma, beta, running_mean,
                          running_var, eps=1e-5):
    """DecoderBlock forward (upsample_mode='up', BN_enable=True).

    x_nchw:      (N, Cin, H, W)
    weight_oihw: (Cout, Cin, 3, 3)  (Conv2d weight, bias=False)
    Returns:     (N, Cout, 2H, 2W) float32
    """
    N, Cin, H, W = x_nchw.shape
    Cout = weight_oihw.shape[0]
    gen = _tpu_generation()

    # Lane-dense channel padding; output tile width gated on MXU width
    # (v5e MXU is 128-wide -> TCO=256 only costs VMEM there).
    Cout_p = ((Cout + 127) // 128) * 128
    TCO = 256 if (gen >= 6 and Cout_p % 256 == 0) else 128
    acc_budget = (2 << 20) if gen >= 7 else (4 << 20)
    TH = _pick_row_tile(H, W, TCO, acc_budget)

    # --- glue: NCHW -> NHWC, ReplicationPad2d(1), pack the kw taps into the
    #     channel (contraction) dim: (N, H+2, W, 3*Cin), bf16 for the MXU. ---
    x = jnp.transpose(x_nchw, (0, 2, 3, 1))
    xp = jnp.pad(x, ((0, 0), (1, 1), (1, 1), (0, 0)), mode="edge")
    xs = jnp.concatenate([xp[:, :, kw:kw + W, :] for kw in range(3)],
                         axis=-1).astype(jnp.bfloat16)        # (N, H+2, W, 3*Cin)

    # Conv weight (Cout,Cin,3,3) -> (kh, kw*Cin, Cout_p), BN scale folded in
    # f32 BEFORE the bf16 cast (exact fold, single rounding step).
    scale = gamma / jnp.sqrt(running_var + eps)               # (Cout,)
    w = jnp.transpose(weight_oihw, (2, 3, 1, 0)).astype(jnp.float32)
    w = w * scale[None, None, None, :]
    w = jnp.pad(w, ((0, 0), (0, 0), (0, 0), (0, Cout_p - Cout)))
    w = w.reshape(3, 3 * Cin, Cout_p).astype(jnp.bfloat16)
    bias = jnp.pad(beta - running_mean * scale, (0, Cout_p - Cout))
    bias = bias.reshape(1, Cout_p).astype(jnp.float32)

    # h innermost: weight/bias block indices constant across all row steps.
    grid = (N, Cout_p // TCO, H // TH)

    # VMEM estimate: double-buffered blocks + f32 accumulator, per-gen cap.
    img_b = (H + 2) * W * 3 * Cin * 2
    w_b = 3 * 3 * Cin * TCO * 2
    out_b = TH * W * TCO * 2
    need = 2 * (img_b + w_b + TCO * 4 + out_b) + TH * W * TCO * 4
    vmem_cap = (48 << 20) if gen >= 7 else (100 << 20)
    vmem_limit = int(min(vmem_cap, max(32 << 20, need * 5 // 4)))

    cost = pl.CostEstimate(
        flops=2 * N * H * W * 9 * Cin * Cout_p,
        transcendentals=0,
        bytes_accessed=int(xs.size) * 2 + N * int(w.size) * 2
                       + N * int(bias.size) * 4 + N * H * W * Cout_p * 2,
    )

    y = pl.pallas_call(
        decoder_block_kernel,
        out_shape=jax.ShapeDtypeStruct((N, H * W, Cout_p), jnp.bfloat16),
        grid_spec=pltpu.PrefetchScalarGridSpec(
            num_scalar_prefetch=0,
            grid=grid,
            in_specs=[
                # Whole kw-packed image per batch element; block index only
                # changes with n, so it is DMA'd once per batch element and
                # revisited across the c/h axes.
                pl.BlockSpec((1, H + 2, W, 3 * Cin),
                             lambda n, c, h: (n, 0, 0, 0)),
                # Weight / bias tiles: constant across h (innermost) -> no
                # per-row-tile re-DMA.
                pl.BlockSpec((3, 3 * Cin, TCO), lambda n, c, h: (0, 0, c)),
                pl.BlockSpec((1, TCO), lambda n, c, h: (0, c)),
            ],
            out_specs=pl.BlockSpec((1, TH * W, TCO), lambda n, c, h: (n, h, c)),
        ),
        compiler_params=pltpu.CompilerParams(
            dimension_semantics=("parallel", "parallel", "parallel"),
            vmem_limit_bytes=vmem_limit,
        ),
        cost_estimate=cost,
    )(xs, w, bias)

    # --- glue: drop channel padding, nearest 2x upsample, NHWC -> NCHW ---
    # Kept bf16 through the layout ops (half the epilogue HBM bytes); f32 last.
    y = y.reshape(N, H, W, Cout_p)[..., :Cout]
    y = jnp.repeat(jnp.repeat(y, 2, axis=1), 2, axis=2)        # (N, 2H, 2W, Cout)
    return jnp.transpose(y, (0, 3, 1, 2)).astype(jnp.float32)  # NCHW f32


def reference_forward(x_nchw, weight_oihw, gamma, beta, rm, rv, eps=1e-5):
    """Pure-JAX/XLA reference matching the kernel's bf16 rounding points."""
    scale = gamma / jnp.sqrt(rv + eps)
    wb = (weight_oihw.astype(jnp.float32) * scale[:, None, None, None])
    wb = wb.astype(jnp.bfloat16).astype(jnp.float32)
    xb = x_nchw.astype(jnp.bfloat16).astype(jnp.float32)
    xp = jnp.pad(xb, ((0, 0), (0, 0), (1, 1), (1, 1)), mode="edge")
    y = lax.conv_general_dilated(
        xp, wb, window_strides=(1, 1), padding="VALID",
        dimension_numbers=("NCHW", "OIHW", "NCHW"))
    y = y + (beta - rm * scale)[None, :, None, None]
    y = jnp.maximum(y, 0.0).astype(jnp.bfloat16).astype(jnp.float32)
    y = jnp.repeat(jnp.repeat(y, 2, axis=2), 2, axis=3)
    return y


if __name__ == "__main__":
    key = jax.random.PRNGKey(0)
    N, Cin, H, W = 2, 4, 16, 16
    Cout = 8                     # mid_channels unused for upsample_mode='up'

    k1, k2, k3, k4 = jax.random.split(key, 4)
    x = jax.random.normal(k1, (N, Cin, H, W), dtype=jnp.float32)
    conv_w = jax.random.normal(k2, (Cout, Cin, 3, 3), dtype=jnp.float32) * 0.1
    gamma = 1.0 + 0.1 * jax.random.normal(k3, (Cout,), dtype=jnp.float32)
    beta = 0.1 * jax.random.normal(k4, (Cout,), dtype=jnp.float32)
    running_mean = jnp.zeros((Cout,), jnp.float32)   # fresh BatchNorm2d stats
    running_var = jnp.ones((Cout,), jnp.float32)

    out = decoder_block_forward(x, conv_w, gamma, beta, running_mean, running_var)
    out = jax.block_until_ready(out)
    assert out.shape == (N, Cout, 2 * H, 2 * W), out.shape

    ref = jax.block_until_ready(
        reference_forward(x, conv_w, gamma, beta, running_mean, running_var))
    assert jnp.allclose(out, ref, atol=1e-2, rtol=1e-2), \
        float(jnp.max(jnp.abs(out - ref)))

    print("KERNEL_OK")
</pallas_src>

<mosaic_0001>
module attributes {stable_mosaic.version = 11 : i64} {
  func.func @decoder_block_kernel(%arg0: i32, %arg1: i32, %arg2: i32, %arg3: memref<1x18x16x12xbf16, #tpu.memory_space<vmem>>, %arg4: memref<3x12x128xbf16, #tpu.memory_space<vmem>>, %arg5: memref<1x128xf32, #tpu.memory_space<vmem>>, %arg6: memref<1x256x128xbf16, #tpu.memory_space<vmem>>) attributes {dimension_semantics = [#tpu.dimension_semantics<parallel>, #tpu.dimension_semantics<parallel>, #tpu.dimension_semantics<parallel>], iteration_bounds = array<i64: 2, 1, 1>, scalar_prefetch = 0 : i64, scratch_operands = 0 : i64, tpu.core_type = #tpu.core_type<tc>, window_params = [{transform_indices = @transform_0, window_bounds = array<i64: 1, 18, 16, 12>}, {transform_indices = @transform_1, window_bounds = array<i64: 3, 12, 128>}, {transform_indices = @transform_2, window_bounds = array<i64: 1, 128>}, {transform_indices = @transform_3, window_bounds = array<i64: 1, 256, 128>}]} {
    %c16_i32 = arith.constant 16 : i32
    %0 = arith.muli %arg2, %c16_i32 : i32
    %cst = arith.constant 0.000000e+00 : f32
    %1 = vector.broadcast %cst : f32 to vector<256x128xf32>
    %c0_i32 = arith.constant 0 : i32
    %2 = arith.addi %0, %c0_i32 : i32
    %c0 = arith.constant 0 : index
    %3 = arith.index_cast %2 : i32 to index
    %c0_0 = arith.constant 0 : index
    %c0_1 = arith.constant 0 : index
    %4 = vector.load %arg3[%c0, %3, %c0_0, %c0_1] : memref<1x18x16x12xbf16, #tpu.memory_space<vmem>>, vector<1x16x16x12xbf16>
    %5 = vector.shape_cast %4 : vector<1x16x16x12xbf16> to vector<16x16x12xbf16>
    %6 = vector.shape_cast %5 : vector<16x16x12xbf16> to vector<256x12xbf16>
    %c0_2 = arith.constant 0 : index
    %c0_3 = arith.constant 0 : index
    %c0_4 = arith.constant 0 : index
    %7 = vector.load %arg4[%c0_2, %c0_3, %c0_4] : memref<3x12x128xbf16, #tpu.memory_space<vmem>>, vector<1x12x128xbf16>
    %8 = vector.shape_cast %7 : vector<1x12x128xbf16> to vector<12x128xbf16>
    %cst_5 = arith.constant dense<0.000000e+00> : vector<256x128xf32>
    %9 = tpu.matmul %6, %8, %cst_5 {dimension_numbers = #tpu.dot_dimension_numbers<[1], [0], [0], [1], [0, 0, 1, 1], [], []>} : vector<256x12xbf16>, vector<12x128xbf16>, vector<256x128xf32> -> vector<256x128xf32>
    %10 = arith.addf %1, %9 : vector<256x128xf32>
    %c1_i32 = arith.constant 1 : i32
    %11 = arith.addi %0, %c1_i32 : i32
    %c0_6 = arith.constant 0 : index
    %12 = arith.index_cast %11 : i32 to index
    %c0_7 = arith.constant 0 : index
    %c0_8 = arith.constant 0 : index
    %13 = vector.load %arg3[%c0_6, %12, %c0_7, %c0_8] : memref<1x18x16x12xbf16, #tpu.memory_space<vmem>>, vector<1x16x16x12xbf16>
    %14 = vector.shape_cast %13 : vector<1x16x16x12xbf16> to vector<16x16x12xbf16>
    %15 = vector.shape_cast %14 : vector<16x16x12xbf16> to vector<256x12xbf16>
    %c1 = arith.constant 1 : index
    %c0_9 = arith.constant 0 : index
    %c0_10 = arith.constant 0 : index
    %16 = vector.load %arg4[%c1, %c0_9, %c0_10] : memref<3x12x128xbf16, #tpu.memory_space<vmem>>, vector<1x12x128xbf16>
    %17 = vector.shape_cast %16 : vector<1x12x128xbf16> to vector<12x128xbf16>
    %cst_11 = arith.constant dense<0.000000e+00> : vector<256x128xf32>
    %18 = tpu.matmul %15, %17, %cst_11 {dimension_numbers = #tpu.dot_dimension_numbers<[1], [0], [0], [1], [0, 0, 1, 1], [], []>} : vector<256x12xbf16>, vector<12x128xbf16>, vector<256x128xf32> -> vector<256x128xf32>
    %19 = arith.addf %10, %18 : vector<256x128xf32>
    %c2_i32 = arith.constant 2 : i32
    %20 = arith.addi %0, %c2_i32 : i32
    %c0_12 = arith.constant 0 : index
    %21 = arith.index_cast %20 : i32 to index
    %c0_13 = arith.constant 0 : index
    %c0_14 = arith.constant 0 : index
    %22 = vector.load %arg3[%c0_12, %21, %c0_13, %c0_14] : memref<1x18x16x12xbf16, #tpu.memory_space<vmem>>, vector<1x16x16x12xbf16>
    %23 = vector.shape_cast %22 : vector<1x16x16x12xbf16> to vector<16x16x12xbf16>
    %24 = vector.shape_cast %23 : vector<16x16x12xbf16> to vector<256x12xbf16>
    %c2 = arith.constant 2 : index
    %c0_15 = arith.constant 0 : index
    %c0_16 = arith.constant 0 : index
    %25 = vector.load %arg4[%c2, %c0_15, %c0_16] : memref<3x12x128xbf16, #tpu.memory_space<vmem>>, vector<1x12x128xbf16>
    %26 = vector.shape_cast %25 : vector<1x12x128xbf16> to vector<12x128xbf16>
    %cst_17 = arith.constant dense<0.000000e+00> : vector<256x128xf32>
    %27 = tpu.matmul %24, %26, %cst_17 {dimension_numbers = #tpu.dot_dimension_numbers<[1], [0], [0], [1], [0, 0, 1, 1], [], []>} : vector<256x12xbf16>, vector<12x128xbf16>, vector<256x128xf32> -> vector<256x128xf32>
    %28 = arith.addf %19, %27 : vector<256x128xf32>
    %c0_18 = arith.constant 0 : index
    %c0_19 = arith.constant 0 : index
    %29 = vector.load %arg5[%c0_18, %c0_19] : memref<1x128xf32, #tpu.memory_space<vmem>>, vector<1x128xf32>
    %30 = vector.broadcast %29 : vector<1x128xf32> to vector<256x128xf32>
    %31 = arith.addf %28, %30 : vector<256x128xf32>
    %cst_20 = arith.constant 0.000000e+00 : f32
    %32 = vector.broadcast %cst_20 : f32 to vector<256x128xf32>
    %33 = arith.maximumf %31, %32 : vector<256x128xf32>
    %34 = arith.truncf %33 : vector<256x128xf32> to vector<256x128xbf16>
    %c0_21 = arith.constant 0 : index
    %c0_22 = arith.constant 0 : index
    %c0_23 = arith.constant 0 : index
    %35 = vector.load %arg6[%c0_21, %c0_22, %c0_23] : memref<1x256x128xbf16, #tpu.memory_space<vmem>>, vector<1x256x128xbf16>
    %36 = vector.shape_cast %35 : vector<1x256x128xbf16> to vector<256x128xbf16>
    %37 = vector.shape_cast %34 : vector<256x128xbf16> to vector<1x256x128xbf16>
    tpu.vector_store %arg6[%c0_21, %c0_22, %c0_23], %37 {strides = array<i32>} : memref<1x256x128xbf16, #tpu.memory_space<vmem>>, vector<1x256x128xbf16>,
    return
  }
  func.func @transform_0(%arg0: i32, %arg1: i32, %arg2: i32) -> (i32, i32, i32, i32) {
    %c0_i32 = arith.constant 0 : i32
    %c0_i32_0 = arith.constant 0 : i32
    %c0_i32_1 = arith.constant 0 : i32
    %c0_i32_2 = arith.constant 0 : i32
    return %arg0, %c0_i32, %c0_i32_0, %c0_i32_1 : i32, i32, i32, i32
  }
  func.func @transform_1(%arg0: i32, %arg1: i32, %arg2: i32) -> (i32, i32, i32) {
    %c0_i32 = arith.constant 0 : i32
    %c0_i32_0 = arith.constant 0 : i32
    %c0_i32_1 = arith.constant 0 : i32
    return %c0_i32, %c0_i32_0, %arg1 : i32, i32, i32
  }
  func.func @transform_2(%arg0: i32, %arg1: i32, %arg2: i32) -> (i32, i32) {
    %c0_i32 = arith.constant 0 : i32
    %c0_i32_0 = arith.constant 0 : i32
    return %c0_i32, %arg1 : i32, i32
  }
  func.func @transform_3(%arg0: i32, %arg1: i32, %arg2: i32) -> (i32, i32, i32) {
    %c0_i32 = arith.constant 0 : i32
    return %arg0, %arg2, %arg1 : i32, i32, i32
  }
}

</mosaic_0001>

<llo_original>
// kernel: tpu_custom_call.1
$region0: #{tpu_custom_call.1}
  #allocation0 [shape = 'u32[]', space=smem, size = 0x4, offset = 0x4, fixed_abs, tag = 'smem constant byte address 0x4 - core index']
  #allocation1 [shape = 'u32[144,128]{1,0:T(1,128)}', space=vmem, size = 0x12000, scoped, tag = 'internal scratch']
  %s0 = inlined_call_operand.vmem [shape: bf16[2,18,16,12], index: 0, kind: input, shape index: {}]
  %s1 = inlined_call_operand.vmem [shape: bf16[3,12,128], index: 1, kind: input, shape index: {}]
  %s2 = inlined_call_operand.vmem [shape: f32[1,128], index: 2, kind: input, shape index: {}]
  %s3 = inlined_call_operand.hbm [shape: bf16[2,256,128], index: 3, kind: output, shape index: {}]
  %s4 = sld [smem:[#allocation0]]
  $region45: #{tpu_custom_call.1} parent=0
    _
  %s6 = ssub.s32 1, %s4
  %s7 = scalar_select 0, %s6, %s4
  $region1: #{tpu_custom_call.1} parent=0
    #allocation2 [shape = 'u8[131072]{0}', space=vmem, size = 0x20000, scoped, tag = 'output window, operand 0']
    #allocation3 [shape = 's32[2]{0}', space=sflag, size = 0x8, scoped, tag = 'scoped memory for tpu_custom_call.1']
    %8 = vsyncpa [#allocation3], 0
    %s9 = scalar_lea.sflag [#allocation3], 1
    %10 = vsyncpa %s9, 0
    loop: start=0, step=1, limit=4
    $region2: #{tpu_custom_call.1} parent=1 // loop_pre_header
      _
    $region3: #{tpu_custom_call.1} parent=1 // loop_header
      %s12 = sphi 0, %s16
      %p13 = scmp.ge.s32.totalorder %s12, 4
      %s19 = sphi 0, %s38
      %s20 = sphi 0, %s34
      %s21 = sphi 0, %s30
      %s22 = sphi 0, %s19
      %s23 = sphi 0, %s20
      %s24 = sphi 0, %s21
      %s25 = sphi 0, %s22
      %s26 = sphi 0, %s23
      %s27 = sphi 0, %s24
      %s41 = sphi 0, %s43
      %s44 = sphi 0, %s41
      %s45 = sphi 0, %s44
      %s61 = sphi 0, %s45
      %s67 = sphi 0, %s69
      %s70 = sphi 0, %s67
      %s71 = sphi 0, %s70
      %s87 = sphi 0, %s71
      %s93 = sphi 0, %s95
      %s96 = sphi 0, %s93
      %s97 = sphi 0, %s96
      %s113 = sphi 0, %s97
      %s123 = sphi 0, %s125
      %s126 = sphi 0, %s123
      %s127 = sphi 0, %s126
      %s143 = sphi 0, %s127
    $region4: #{tpu_custom_call.1} parent=1 // loop_header_branch
      %15 = sbr.rel (%p13) target = $region8
    $region5: #{tpu_custom_call.1} parent=1 // loop_body
      %s17 = ssub.s32 %s12, 1
      %s18 = ssub.s32 %s12, 2
      %s28 = sadd.s32 1, %s21
      %p29 = scmp.ge.s32.totalorder %s28, 1
      %s30 = scalar_select %p29, 0, %s28
      %s31 = sadd.s32 1, %s20
      %s32 = scalar_select %p29, %s31, %s20
      %p33 = scmp.ge.s32.totalorder %s32, 1
      %s34 = scalar_select %p33, 0, %s32
      %s35 = sadd.s32 1, %s19
      %s36 = scalar_select %p33, %s35, %s19
      %p37 = scmp.ge.s32.totalorder %s36, 2
      %s38 = scalar_select %p37, 0, %s36
      %s39 = ssub.s32 %s19, %s38
      %p40 = scmp.eq.s32.totalorder %s39, 0
      %s42 = sadd.s32 %s41, 1
      %s43 = scalar_select %p40, %s41, %s42
      %p46 = pneg %p40
      %p47 = scmp.eq.s32.totalorder %s12, 1
      %p48 = por %p46, %p47
      %p49 = scmp.ne.s32.totalorder %s41, %s44
      %p50 = scmp.eq.s32.totalorder %s12, 0
      %p51 = por %p49, %p50
      %p52 = scmp.ne.s32.totalorder %s41, %s44
      %p53 = scmp.eq.s32.totalorder %s17, 1
      %p54 = por %p52, %p53
      %p55 = scmp.ne.s32.totalorder %s44, %s45
      %p56 = scmp.eq.s32.totalorder %s17, 0
      %p57 = por %p55, %p56
      %p58 = scmp.ne.s32.totalorder %s44, %s45
      %p59 = scmp.eq.s32.totalorder %s18, 1
      %p60 = por %p58, %p59
      %p62 = scmp.ne.s32.totalorder %s45, %s61
      %p63 = scmp.eq.s32.totalorder %s18, 0
      %p64 = por %p62, %p63
      %s65 = ssub.s32 %s20, %s34
      %p66 = scmp.eq.s32.totalorder %s65, 0
      %s68 = sadd.s32 %s67, 1
      %s69 = scalar_select %p66, %s67, %s68
      %p72 = pneg %p66
      %p73 = scmp.eq.s32.totalorder %s12, 1
      %p74 = por %p72, %p73
      %p75 = scmp.ne.s32.totalorder %s67, %s70
      %p76 = scmp.eq.s32.totalorder %s12, 0
      %p77 = por %p75, %p76
      %p78 = scmp.ne.s32.totalorder %s67, %s70
      %p79 = scmp.eq.s32.totalorder %s17, 1
      %p80 = por %p78, %p79
      %p81 = scmp.ne.s32.totalorder %s70, %s71
      %p82 = scmp.eq.s32.totalorder %s17, 0
      %p83 = por %p81, %p82
      %p84 = scmp.ne.s32.totalorder %s70, %s71
      %p85 = scmp.eq.s32.totalorder %s18, 1
      %p86 = por %p84, %p85
      %p88 = scmp.ne.s32.totalorder %s71, %s87
      %p89 = scmp.eq.s32.totalorder %s18, 0
      %p90 = por %p88, %p89
      %s91 = ssub.s32 %s20, %s34
      %p92 = scmp.eq.s32.totalorder %s91, 0
      %s94 = sadd.s32 %s93, 1
      %s95 = scalar_select %p92, %s93, %s94
      %p98 = pneg %p92
      %p99 = scmp.eq.s32.totalorder %s12, 1
      %p100 = por %p98, %p99
      %p101 = scmp.ne.s32.totalorder %s93, %s96
      %p102 = scmp.eq.s32.totalorder %s12, 0
      %p103 = por %p101, %p102
      %p104 = scmp.ne.s32.totalorder %s93, %s96
      %p105 = scmp.eq.s32.totalorder %s17, 1
      %p106 = por %p104, %p105
      %p107 = scmp.ne.s32.totalorder %s96, %s97
      %p108 = scmp.eq.s32.totalorder %s17, 0
      %p109 = por %p107, %p108
      %p110 = scmp.ne.s32.totalorder %s96, %s97
      %p111 = scmp.eq.s32.totalorder %s18, 1
      %p112 = por %p110, %p111
      %p114 = scmp.ne.s32.totalorder %s97, %s113
      %p115 = scmp.eq.s32.totalorder %s18, 0
      %p116 = por %p114, %p115
      %s117 = ssub.s32 %s19, %s38
      %s118 = ssub.s32 %s21, %s30
      %s119 = sor.u32 %s117, %s118
      %s120 = ssub.s32 %s20, %s34
      %s121 = sor.u32 %s119, %s120
      %p122 = scmp.eq.s32.totalorder %s121, 0
      %s124 = sadd.s32 %s123, 1
      %s125 = scalar_select %p122, %s123, %s124
      %p128 = pneg %p122
      %p129 = scmp.eq.s32.totalorder %s12, 1
      %p130 = por %p128, %p129
      %p131 = scmp.ne.s32.totalorder %s123, %s126
      %p132 = scmp.eq.s32.totalorder %s12, 0
      %p133 = por %p131, %p132
      %p134 = scmp.ne.s32.totalorder %s123, %s126
      %p135 = scmp.eq.s32.totalorder %s17, 1
      %p136 = por %p134, %p135
      %p137 = scmp.ne.s32.totalorder %s126, %s127
      %p138 = scmp.eq.s32.totalorder %s17, 0
      %p139 = por %p137, %p138
      %p140 = scmp.ne.s32.totalorder %s126, %s127
      %p141 = scmp.eq.s32.totalorder %s18, 1
      %p142 = por %p140, %p141
      %p144 = scmp.ne.s32.totalorder %s127, %s143
      %p145 = scmp.eq.s32.totalorder %s18, 0
      %p146 = por %p144, %p145
      %p147 = scmp.le.s32.totalorder 1, %s12
      %p148 = scmp.lt.s32.totalorder %s12, 3
      %p149 = pnand %p147, %p148
      %p150 = pneg %p149
      // Predicated region
      $region9: #{tpu_custom_call.1} parent=5 // pred_check
        _
      $region10: #{tpu_custom_call.1} parent=5 // pred_check_branch
        %152 = sbr.rel (%p149) target = $region12
      $region11: #{tpu_custom_call.1} parent=5 // pred_region
        %s153 = ssub.s32 %s12, 1
        // Predicated region
        $region13: #{tpu_custom_call.1} parent=11 // pred_check
          %p154 = pneg %p83
        $region14: #{tpu_custom_call.1} parent=11 // pred_check_branch
          %156 = sbr.rel (%p154) target = $region16
        $region15: #{tpu_custom_call.1} parent=11 // pred_region
          %p157 = scmp.lt.s32.totalorder %s23, 0
          %s158 = scalar_select %p157, %s23, 0
          %s159 = smul.addr %s158, 4
          %s160 = scalar_lea.vmem %s1, %s159
        $region16: #{tpu_custom_call.1} parent=11 // pred_fallthru
          _
        // Predicated region
        $region17: #{tpu_custom_call.1} parent=11 // pred_check
          %p161 = pneg %p109
        $region18: #{tpu_custom_call.1} parent=11 // pred_check_branch
          %163 = sbr.rel (%p161) target = $region20
        $region19: #{tpu_custom_call.1} parent=11 // pred_region
          %p164 = scmp.lt.s32.totalorder %s23, 0
          %s165 = scalar_select %p164, %s23, 0
          %s166 = scalar_lea.vmem %s2, %s165
        $region20: #{tpu_custom_call.1} parent=11 // pred_fallthru
          _
      $region12: #{tpu_custom_call.1} parent=5 // pred_fallthru
        _
      %p167 = scmp.lt.s32.totalorder %s12, 2
      // Predicated region
      $region21: #{tpu_custom_call.1} parent=5 // pred_check
        %p168 = pneg %p167
      $region22: #{tpu_custom_call.1} parent=5 // pred_check_branch
        %170 = sbr.rel (%p168) target = $region24
      $region23: #{tpu_custom_call.1} parent=5 // pred_region
        // Predicated region
        $region25: #{tpu_custom_call.1} parent=23 // pred_check
          %p171 = pneg %p51
        $region26: #{tpu_custom_call.1} parent=23 // pred_check_branch
          %173 = sbr.rel (%p171) target = $region28
        $region27: #{tpu_custom_call.1} parent=23 // pred_region
          %p174 = scmp.lt.s32.totalorder %s19, 1
          %s175 = scalar_select %p174, %s19, 1
          %s176 = smul.addr %s175, 36
          %s177 = smul.addr %s176, 4
          %s178 = scalar_lea.vmem %s0, %s177
        $region28: #{tpu_custom_call.1} parent=23 // pred_fallthru
          _
      $region24: #{tpu_custom_call.1} parent=5 // pred_fallthru
        _
      %p179 = scmp.le.s32.totalorder 1, %s12
      %p180 = scmp.lt.s32.totalorder %s12, 3
      %p181 = pnand %p179, %p180
      %p182 = pneg %p181
      // Predicated region
      $region29: #{tpu_custom_call.1} parent=5 // pred_check
        _
      $region30: #{tpu_custom_call.1} parent=5 // pred_check_branch
        %184 = sbr.rel (%p181) target = $region32
      $region31: #{tpu_custom_call.1} parent=5 // pred_region
        %s185 = ssub.s32 %s12, 1
        %p186 = scmp.lt.s32.totalorder %s22, 1
        %s187 = scalar_select %p186, %s22, 1
        %s188 = smul.addr %s187, 36
        %s189 = smul.addr %s188, 4
        %s190 = scalar_lea.vmem %s0, %s189
        %p191 = pneg %p57
        %p192 = pneg %p54
        %p193 = scmp.lt.s32.totalorder %s23, 0
        %s194 = scalar_select %p193, %s23, 0
        %s195 = smul.addr %s194, 4
        %s196 = scalar_lea.vmem %s1, %s195
        %p197 = pneg %p83
        %p198 = pneg %p80
        %p199 = scmp.lt.s32.totalorder %s23, 0
        %s200 = scalar_select %p199, %s23, 0
        %s201 = scalar_lea.vmem %s2, %s200
        %p202 = pneg %p109
        %p203 = pneg %p106
        %p204 = pneg %p139
        %p205 = pneg %p136
        %s206 = sand.u32 %s126, 1
        %s207 = scalar_lea.sflag [#allocation3], %s206
        %s208 = sand.u32 %s126, 1
        %s209 = smul.addr %s208, 128
        %s210 = scalar_lea.vmem [#allocation2], %s209
        %p211 = scmp.lt.s32.totalorder %s22, 1
        %s212 = scalar_select %p211, %s22, 1
        %s213 = smul.addr %s212, 36
        %s214 = smul.addr %s213, 4
        %s215 = scalar_lea.vmem %s0, %s214
        %p216 = scmp.lt.s32.totalorder %s23, 0
        %s217 = scalar_select %p216, %s23, 0
        %s218 = smul.addr %s217, 4
        %s219 = scalar_lea.vmem %s1, %s218
        %p220 = scmp.lt.s32.totalorder %s23, 0
        %s221 = scalar_select %p220, %s23, 0
        %s222 = scalar_lea.vmem %s2, %s221
        %s223 = smul.u32 32, %s24
        %s225 = smul.u32 %s24, 16
        %s226 = smul.u32 %s225, 2
        %s227 = smul.addr %s226, 4
        %s228 = scalar_lea.vmem %s215, %s227
        %v229 = vld [vmem:[%s228] sm:$0xf]
        %v230 = vld [vmem:[%s228 + $0x4] sm:$0xf]
        %v231 = vld [vmem:[%s228 + $0x8] sm:$0xf]
        %v232 = vld [vmem:[%s228 + $0xc] sm:$0xf]
        %v233 = vld [vmem:[%s228 + $0x10] sm:$0xf]
        %v234 = vld [vmem:[%s228 + $0x14] sm:$0xf]
        %v235 = vld [vmem:[%s228 + $0x18] sm:$0xf]
        %v236 = vld [vmem:[%s228 + $0x1c] sm:$0xf]
        %v237 = vld [vmem:[%s228 + $0x20] sm:$0xf]
        %v238 = vld [vmem:[%s228 + $0x24] sm:$0xf]
        %v239 = vld [vmem:[%s228 + $0x28] sm:$0xf]
        %v240 = vld [vmem:[%s228 + $0x2c] sm:$0xf]
        %v241 = vld [vmem:[%s228 + $0x30] sm:$0xf]
        %v242 = vld [vmem:[%s228 + $0x34] sm:$0xf]
        %v243 = vld [vmem:[%s228 + $0x38] sm:$0xf]
        %v244 = vld [vmem:[%s228 + $0x3c] sm:$0xf]
        %v245 = vld [vmem:[%s228 + $0x40] sm:$0xf]
        %v246 = vld [vmem:[%s228 + $0x44] sm:$0xf]
        %v247 = vld [vmem:[%s228 + $0x48] sm:$0xf]
        %v248 = vld [vmem:[%s228 + $0x4c] sm:$0xf]
        %v249 = vld [vmem:[%s228 + $0x50] sm:$0xf]
        %v250 = vld [vmem:[%s228 + $0x54] sm:$0xf]
        %v251 = vld [vmem:[%s228 + $0x58] sm:$0xf]
        %v252 = vld [vmem:[%s228 + $0x5c] sm:$0xf]
        %v253 = vld [vmem:[%s228 + $0x60] sm:$0xf]
        %v254 = vld [vmem:[%s228 + $0x64] sm:$0xf]
        %v255 = vld [vmem:[%s228 + $0x68] sm:$0xf]
        %v256 = vld [vmem:[%s228 + $0x6c] sm:$0xf]
        %v257 = vld [vmem:[%s228 + $0x70] sm:$0xf]
        %v258 = vld [vmem:[%s228 + $0x74] sm:$0xf]
        %v259 = vld [vmem:[%s228 + $0x78] sm:$0xf]
        %v260 = vld [vmem:[%s228 + $0x7c] sm:$0xf]
        %v261 = vld [vmem:[%s219] sm:$0xf]
        %v262 = vld [vmem:[%s219 + $0x4] sm:$0x3]
        %s263 = sadd.s32 %s225, 1
        %s264 = smul.u32 %s263, 2
        %s265 = smul.addr %s264, 4
        %s266 = scalar_lea.vmem %s215, %s265
        %v267 = vld [vmem:[%s266] sm:$0xf]
        %v268 = vld [vmem:[%s266 + $0x4] sm:$0xf]
        %v269 = vld [vmem:[%s266 + $0x8] sm:$0xf]
        %v270 = vld [vmem:[%s266 + $0xc] sm:$0xf]
        %v271 = vld [vmem:[%s266 + $0x10] sm:$0xf]
        %v272 = vld [vmem:[%s266 + $0x14] sm:$0xf]
        %v273 = vld [vmem:[%s266 + $0x18] sm:$0xf]
        %v274 = vld [vmem:[%s266 + $0x1c] sm:$0xf]
        %v275 = vld [vmem:[%s266 + $0x20] sm:$0xf]
        %v276 = vld [vmem:[%s266 + $0x24] sm:$0xf]
        %v277 = vld [vmem:[%s266 + $0x28] sm:$0xf]
        %v278 = vld [vmem:[%s266 + $0x2c] sm:$0xf]
        %v279 = vld [vmem:[%s266 + $0x30] sm:$0xf]
        %v280 = vld [vmem:[%s266 + $0x34] sm:$0xf]
        %v281 = vld [vmem:[%s266 + $0x38] sm:$0xf]
        %v282 = vld [vmem:[%s266 + $0x3c] sm:$0xf]
        %v283 = vld [vmem:[%s266 + $0x40] sm:$0xf]
        %v284 = vld [vmem:[%s266 + $0x44] sm:$0xf]
        %v285 = vld [vmem:[%s266 + $0x48] sm:$0xf]
        %v286 = vld [vmem:[%s266 + $0x4c] sm:$0xf]
        %v287 = vld [vmem:[%s266 + $0x50] sm:$0xf]
        %v288 = vld [vmem:[%s266 + $0x54] sm:$0xf]
        %v289 = vld [vmem:[%s266 + $0x58] sm:$0xf]
        %v290 = vld [vmem:[%s266 + $0x5c] sm:$0xf]
        %v291 = vld [vmem:[%s266 + $0x60] sm:$0xf]
        %v292 = vld [vmem:[%s266 + $0x64] sm:$0xf]
        %v293 = vld [vmem:[%s266 + $0x68] sm:$0xf]
        %v294 = vld [vmem:[%s266 + $0x6c] sm:$0xf]
        %v295 = vld [vmem:[%s266 + $0x70] sm:$0xf]
        %v296 = vld [vmem:[%s266 + $0x74] sm:$0xf]
        %v297 = vld [vmem:[%s266 + $0x78] sm:$0xf]
        %v298 = vld [vmem:[%s266 + $0x7c] sm:$0xf]
        %s299 = scalar_lea.vmem %s219, 8
        %v300 = vld [vmem:[%s299] sm:$0xf]
        %v301 = vld [vmem:[%s299 + $0x4] sm:$0x3]
        %v334 = vunpack.c.l.b16 %v267
        %v335 = vunpack.c.l.b16 %v268
        %v336 = vunpack.c.l.b16 %v269
        %v337 = vunpack.c.l.b16 %v270
        %v338 = vunpack.c.l.b16 %v271
        %v339 = vunpack.c.l.b16 %v272
        %v340 = vunpack.c.l.b16 %v273
        %v341 = vunpack.c.l.b16 %v274
        %v342 = vunpack.c.l.b16 %v275
        %v343 = vunpack.c.l.b16 %v276
        %v344 = vunpack.c.l.b16 %v277
        %v345 = vunpack.c.l.b16 %v278
        %v346 = vunpack.c.l.b16 %v279
        %v347 = vunpack.c.l.b16 %v280
        %v348 = vunpack.c.l.b16 %v281
        %v349 = vunpack.c.l.b16 %v282
        %v350 = vunpack.c.l.b16 %v283
        %v351 = vunpack.c.l.b16 %v284
        %v352 = vunpack.c.l.b16 %v285
        %v353 = vunpack.c.l.b16 %v286
        %v354 = vunpack.c.l.b16 %v287
        %v355 = vunpack.c.l.b16 %v288
        %v356 = vunpack.c.l.b16 %v289
        %v357 = vunpack.c.l.b16 %v290
        %v358 = vunpack.c.l.b16 %v291
        %v359 = vunpack.c.l.b16 %v292
        %v360 = vunpack.c.l.b16 %v293
        %v361 = vunpack.c.l.b16 %v294
        %v362 = vunpack.c.l.b16 %v295
        %v363 = vunpack.c.l.b16 %v296
        %v364 = vunpack.c.l.b16 %v297
        %v365 = vunpack.c.l.b16 %v298
        %v366 = vpack.c.b16 %v335, %v334
        %v367 = vpack.c.b16 %v337, %v336
        %v368 = vpack.c.b16 %v339, %v338
        %v369 = vpack.c.b16 %v341, %v340
        %v370 = vpack.c.b16 %v343, %v342
        %v371 = vpack.c.b16 %v345, %v344
        %v372 = vpack.c.b16 %v347, %v346
        %v373 = vpack.c.b16 %v349, %v348
        %v374 = vpack.c.b16 %v351, %v350
        %v375 = vpack.c.b16 %v353, %v352
        %v376 = vpack.c.b16 %v355, %v354
        %v377 = vpack.c.b16 %v357, %v356
        %v378 = vpack.c.b16 %v359, %v358
        %v379 = vpack.c.b16 %v361, %v360
        %v380 = vpack.c.b16 %v363, %v362
        %v381 = vpack.c.b16 %v365, %v364
        %v384 = vunpack.c.l.b16 %v300
        %v385 = vunpack.c.l.b16 %v301
        %v386 = vpack.c.b16 %v385, %v384
        %vm387 = vcmask 97280
        %v389 = vsel %vm387, %v366, 0
        %v392 = vsel %vm387, %v367, 0
        %v395 = vsel %vm387, %v368, 0
        %v398 = vsel %vm387, %v369, 0
        %v401 = vsel %vm387, %v370, 0
        %v404 = vsel %vm387, %v371, 0
        %v407 = vsel %vm387, %v372, 0
        %v410 = vsel %vm387, %v373, 0
        %v413 = vsel %vm387, %v374, 0
        %v416 = vsel %vm387, %v375, 0
        %v419 = vsel %vm387, %v376, 0
        %v422 = vsel %vm387, %v377, 0
        %v425 = vsel %vm387, %v378, 0
        %v428 = vsel %vm387, %v379, 0
        %v431 = vsel %vm387, %v380, 0
        %v434 = vsel %vm387, %v381, 0
        %vm436 = vcmask 1045504
        %v438 = vsel %vm436, %v386, 0
        %440 = vmatprep.subr.bf16.mxu0 0
        %441 = vmatpush1.bf16.msra.mxu0 0
        %442 = vmatprep.subr.bf16.mxu0 0
        %443 = vmatpush1.bf16.msra.mxu0 0
        %444 = vmatprep.subr.bf16.mxu0 0
        %445 = vmatpush1.bf16.msra.mxu0 0
        %446 = vmatprep.subr.bf16.mxu0 0
        %447 = vmatpush1.bf16.msra.mxu0 0
        %448 = vmatprep.subr.bf16.mxu0 0
        %449 = vmatpush1.bf16.msra.mxu0 0
        %450 = vmatprep.subr.bf16.mxu0 0
        %451 = vmatpush1.bf16.msra.mxu0 0
        %452 = vmatprep.subr.bf16.mxu0 0
        %453 = vmatpush1.bf16.msra.mxu0 0
        %454 = vmatprep.subr.bf16.mxu0 0
        %455 = vmatpush1.bf16.msra.mxu0 %v438
        %456 = vmatprep.subr.bf16.mxu0 0
        %457 = vmatpush2.bf16.msra.mxu0 0
        %458 = vmatprep.subr.bf16.mxu0 0
        %459 = vmatpush2.bf16.msra.mxu0 0
        %460 = vmatprep.subr.bf16.mxu0 0
        %461 = vmatpush2.bf16.msra.mxu0 0
        %462 = vmatprep.subr.bf16.mxu0 0
        %463 = vmatpush2.bf16.msra.mxu0 0
        %464 = vmatprep.subr.bf16.mxu0 0
        %465 = vmatpush2.bf16.msra.mxu0 0
        %466 = vmatprep.subr.bf16.mxu0 0
        %467 = vmatpush2.bf16.msra.mxu0 0
        %468 = vmatprep.subr.bf16.mxu0 0
        %469 = vmatpush2.bf16.msra.mxu0 0
        %470 = vmatprep.subr.bf16.mxu0 0
        %471 = vmatpush2.bf16.msra.mxu0 0
        %472 = vmatprep.mubr.bf16.mxu0 0
        %473 = vmatmul.mubr.bf16.gmra.mxu0 %v389
        %v474 = vpop.f32.mrf.mxu0
        %v475 = vadd.f32 0.0, %v474
        %v476 = vpop.f32.mrf.mxu0
        %v477 = vpop.f32.mrf.mxu0
        %v478 = vadd.f32 0.0, %v477
        %v479 = vpop.f32.mrf.mxu0
        %480 = vmatprep.mubr.bf16.mxu0 0
        %481 = vmatmul.mubr.bf16.gmra.mxu0 %v392
        %v482 = vpop.f32.mrf.mxu0
        %v483 = vadd.f32 0.0, %v482
        %v484 = vpop.f32.mrf.mxu0
        %v485 = vpop.f32.mrf.mxu0
        %v486 = vadd.f32 0.0, %v485
        %v487 = vpop.f32.mrf.mxu0
        %488 = vmatprep.mubr.bf16.mxu0 0
        %489 = vmatmul.mubr.bf16.gmra.mxu0 %v395
        %v490 = vpop.f32.mrf.mxu0
        %v491 = vadd.f32 0.0, %v490
        %v492 = vpop.f32.mrf.mxu0
        %v493 = vpop.f32.mrf.mxu0
        %v494 = vadd.f32 0.0, %v493
        %v495 = vpop.f32.mrf.mxu0
        %496 = vmatprep.mubr.bf16.mxu0 0
        %497 = vmatmul.mubr.bf16.gmra.mxu0 %v398
        %v498 = vpop.f32.mrf.mxu0
        %v499 = vadd.f32 0.0, %v498
        %v500 = vpop.f32.mrf.mxu0
        %v501 = vpop.f32.mrf.mxu0
        %v502 = vadd.f32 0.0, %v501
        %v503 = vpop.f32.mrf.mxu0
        %504 = vmatprep.mubr.bf16.mxu0 0
        %505 = vmatmul.mubr.bf16.gmra.mxu0 %v401
        %v506 = vpop.f32.mrf.mxu0
        %v507 = vadd.f32 0.0, %v506
        %v508 = vpop.f32.mrf.mxu0
        %v509 = vpop.f32.mrf.mxu0
        %v510 = vadd.f32 0.0, %v509
        %v511 = vpop.f32.mrf.mxu0
        %512 = vmatprep.mubr.bf16.mxu0 0
        %513 = vmatmul.mubr.bf16.gmra.mxu0 %v404
        %v514 = vpop.f32.mrf.mxu0
        %v515 = vadd.f32 0.0, %v514
        %v516 = vpop.f32.mrf.mxu0
        %v517 = vpop.f32.mrf.mxu0
        %v518 = vadd.f32 0.0, %v517
        %v519 = vpop.f32.mrf.mxu0
        %520 = vmatprep.mubr.bf16.mxu0 0
        %521 = vmatmul.mubr.bf16.gmra.mxu0 %v407
        %v522 = vpop.f32.mrf.mxu0
        %v523 = vadd.f32 0.0, %v522
        %v524 = vpop.f32.mrf.mxu0
        %v525 = vpop.f32.mrf.mxu0
        %v526 = vadd.f32 0.0, %v525
        %v527 = vpop.f32.mrf.mxu0
        %528 = vmatprep.mubr.bf16.mxu0 0
        %529 = vmatmul.mubr.bf16.gmra.mxu0 %v410
        %v530 = vpop.f32.mrf.mxu0
        %v531 = vadd.f32 0.0, %v530
        %v532 = vpop.f32.mrf.mxu0
        %v533 = vpop.f32.mrf.mxu0
        %v534 = vadd.f32 0.0, %v533
        %v535 = vpop.f32.mrf.mxu0
        %536 = vmatprep.mubr.bf16.mxu0 0
        %537 = vmatmul.mubr.bf16.gmra.mxu0 %v413
        %v538 = vpop.f32.mrf.mxu0
        %v539 = vadd.f32 0.0, %v538
        %v540 = vpop.f32.mrf.mxu0
        %v541 = vpop.f32.mrf.mxu0
        %v542 = vadd.f32 0.0, %v541
        %v543 = vpop.f32.mrf.mxu0
        %544 = vmatprep.mubr.bf16.mxu0 0
        %545 = vmatmul.mubr.bf16.gmra.mxu0 %v416
        %v546 = vpop.f32.mrf.mxu0
        %v547 = vadd.f32 0.0, %v546
        %v548 = vpop.f32.mrf.mxu0
        %v549 = vpop.f32.mrf.mxu0
        %v550 = vadd.f32 0.0, %v549
        %v551 = vpop.f32.mrf.mxu0
        %552 = vmatprep.mubr.bf16.mxu0 0
        %553 = vmatmul.mubr.bf16.gmra.mxu0 %v419
        %v554 = vpop.f32.mrf.mxu0
        %v555 = vadd.f32 0.0, %v554
        %v556 = vpop.f32.mrf.mxu0
        %v557 = vpop.f32.mrf.mxu0
        %v558 = vadd.f32 0.0, %v557
        %v559 = vpop.f32.mrf.mxu0
        %560 = vmatprep.mubr.bf16.mxu0 0
        %561 = vmatmul.mubr.bf16.gmra.mxu0 %v422
        %v562 = vpop.f32.mrf.mxu0
        %v563 = vadd.f32 0.0, %v562
        %v564 = vpop.f32.mrf.mxu0
        %v565 = vpop.f32.mrf.mxu0
        %v566 = vadd.f32 0.0, %v565
        %v567 = vpop.f32.mrf.mxu0
        %568 = vmatprep.mubr.bf16.mxu0 0
        %569 = vmatmul.mubr.bf16.gmra.mxu0 %v425
        %v570 = vpop.f32.mrf.mxu0
        %v571 = vadd.f32 0.0, %v570
        %v572 = vpop.f32.mrf.mxu0
        %v573 = vpop.f32.mrf.mxu0
        %v574 = vadd.f32 0.0, %v573
        %v575 = vpop.f32.mrf.mxu0
        %576 = vmatprep.mubr.bf16.mxu0 0
        %577 = vmatmul.mubr.bf16.gmra.mxu0 %v428
        %v578 = vpop.f32.mrf.mxu0
        %v579 = vadd.f32 0.0, %v578
        %v580 = vpop.f32.mrf.mxu0
        %v581 = vpop.f32.mrf.mxu0
        %v582 = vadd.f32 0.0, %v581
        %v583 = vpop.f32.mrf.mxu0
        %584 = vmatprep.mubr.bf16.mxu0 0
        %585 = vmatmul.mubr.bf16.gmra.mxu0 %v431
        %v586 = vpop.f32.mrf.mxu0
        %v587 = vadd.f32 0.0, %v586
        %v588 = vpop.f32.mrf.mxu0
        %v589 = vpop.f32.mrf.mxu0
        %v590 = vadd.f32 0.0, %v589
        %v591 = vpop.f32.mrf.mxu0
        %592 = vmatprep.mubr.bf16.mxu0 0
        %593 = vmatmul.mubr.bf16.gmra.mxu0 %v434
        %v594 = vpop.f32.mrf.mxu0
        %v595 = vadd.f32 0.0, %v594
        %v596 = vpop.f32.mrf.mxu0
        %v597 = vpop.f32.mrf.mxu0
        %v598 = vadd.f32 0.0, %v597
        %v599 = vpop.f32.mrf.mxu0
        %600 = vdwg.mxu0
        %v633 = vunpack.c.l.b16 %v229
        %v634 = vunpack.c.l.b16 %v230
        %v635 = vunpack.c.l.b16 %v231
        %v636 = vunpack.c.l.b16 %v232
        %v637 = vunpack.c.l.b16 %v233
        %v638 = vunpack.c.l.b16 %v234
        %v639 = vunpack.c.l.b16 %v235
        %v640 = vunpack.c.l.b16 %v236
        %v641 = vunpack.c.l.b16 %v237
        %v642 = vunpack.c.l.b16 %v238
        %v643 = vunpack.c.l.b16 %v239
        %v644 = vunpack.c.l.b16 %v240
        %v645 = vunpack.c.l.b16 %v241
        %v646 = vunpack.c.l.b16 %v242
        %v647 = vunpack.c.l.b16 %v243
        %v648 = vunpack.c.l.b16 %v244
        %v649 = vunpack.c.l.b16 %v245
        %v650 = vunpack.c.l.b16 %v246
        %v651 = vunpack.c.l.b16 %v247
        %v652 = vunpack.c.l.b16 %v248
        %v653 = vunpack.c.l.b16 %v249
        %v654 = vunpack.c.l.b16 %v250
        %v655 = vunpack.c.l.b16 %v251
        %v656 = vunpack.c.l.b16 %v252
        %v657 = vunpack.c.l.b16 %v253
        %v658 = vunpack.c.l.b16 %v254
        %v659 = vunpack.c.l.b16 %v255
        %v660 = vunpack.c.l.b16 %v256
        %v661 = vunpack.c.l.b16 %v257
        %v662 = vunpack.c.l.b16 %v258
        %v663 = vunpack.c.l.b16 %v259
        %v664 = vunpack.c.l.b16 %v260
        %v665 = vpack.c.b16 %v634, %v633
        %v666 = vpack.c.b16 %v636, %v635
        %v667 = vpack.c.b16 %v638, %v637
        %v668 = vpack.c.b16 %v640, %v639
        %v669 = vpack.c.b16 %v642, %v641
        %v670 = vpack.c.b16 %v644, %v643
        %v671 = vpack.c.b16 %v646, %v645
        %v672 = vpack.c.b16 %v648, %v647
        %v673 = vpack.c.b16 %v650, %v649
        %v674 = vpack.c.b16 %v652, %v651
        %v675 = vpack.c.b16 %v654, %v653
        %v676 = vpack.c.b16 %v656, %v655
        %v677 = vpack.c.b16 %v658, %v657
        %v678 = vpack.c.b16 %v660, %v659
        %v679 = vpack.c.b16 %v662, %v661
        %v680 = vpack.c.b16 %v664, %v663
        %v683 = vunpack.c.l.b16 %v261
        %v684 = vunpack.c.l.b16 %v262
        %v685 = vpack.c.b16 %v684, %v683
        %v687 = vsel %vm387, %v665, 0
        %v690 = vsel %vm387, %v666, 0
        %v693 = vsel %vm387, %v667, 0
        %v696 = vsel %vm387, %v668, 0
        %v699 = vsel %vm387, %v669, 0
        %v702 = vsel %vm387, %v670, 0
        %v705 = vsel %vm387, %v671, 0
        %v708 = vsel %vm387, %v672, 0
        %v711 = vsel %vm387, %v673, 0
        %v714 = vsel %vm387, %v674, 0
        %v717 = vsel %vm387, %v675, 0
        %v720 = vsel %vm387, %v676, 0
        %v723 = vsel %vm387, %v677, 0
        %v726 = vsel %vm387, %v678, 0
        %v729 = vsel %vm387, %v679, 0
        %v732 = vsel %vm387, %v680, 0
        %v735 = vsel %vm436, %v685, 0
        %737 = vmatprep.subr.bf16.mxu0 0
        %738 = vmatpush1.bf16.msra.mxu0 0
        %739 = vmatprep.subr.bf16.mxu0 0
        %740 = vmatpush1.bf16.msra.mxu0 0
        %741 = vmatprep.subr.bf16.mxu0 0
        %742 = vmatpush1.bf16.msra.mxu0 0
        %743 = vmatprep.subr.bf16.mxu0 0
        %744 = vmatpush1.bf16.msra.mxu0 0
        %745 = vmatprep.subr.bf16.mxu0 0
        %746 = vmatpush1.bf16.msra.mxu0 0
        %747 = vmatprep.subr.bf16.mxu0 0
        %748 = vmatpush1.bf16.msra.mxu0 0
        %749 = vmatprep.subr.bf16.mxu0 0
        %750 = vmatpush1.bf16.msra.mxu0 0
        %751 = vmatprep.subr.bf16.mxu0 0
        %752 = vmatpush1.bf16.msra.mxu0 %v735
        %753 = vmatprep.subr.bf16.mxu0 0
        %754 = vmatpush2.bf16.msra.mxu0 0
        %755 = vmatprep.subr.bf16.mxu0 0
        %756 = vmatpush2.bf16.msra.mxu0 0
        %757 = vmatprep.subr.bf16.mxu0 0
        %758 = vmatpush2.bf16.msra.mxu0 0
        %759 = vmatprep.subr.bf16.mxu0 0
        %760 = vmatpush2.bf16.msra.mxu0 0
        %761 = vmatprep.subr.bf16.mxu0 0
        %762 = vmatpush2.bf16.msra.mxu0 0
        %763 = vmatprep.subr.bf16.mxu0 0
        %764 = vmatpush2.bf16.msra.mxu0 0
        %765 = vmatprep.subr.bf16.mxu0 0
        %766 = vmatpush2.bf16.msra.mxu0 0
        %767 = vmatprep.subr.bf16.mxu0 0
        %768 = vmatpush2.bf16.msra.mxu0 0
        %769 = vmatprep.mubr.bf16.mxu0 0
        %770 = vmatmul.mubr.bf16.gmra.mxu0 %v687
        %v771 = vpop.f32.mrf.mxu0
        %v772 = vadd.f32 %v475, %v771
        %v773 = vpop.f32.mrf.mxu0
        %v774 = vpop.f32.mrf.mxu0
        %v775 = vadd.f32 %v478, %v774
        %v776 = vpop.f32.mrf.mxu0
        %777 = vmatprep.mubr.bf16.mxu0 0
        %778 = vmatmul.mubr.bf16.gmra.mxu0 %v690
        %v779 = vpop.f32.mrf.mxu0
        %v780 = vadd.f32 %v483, %v779
        %v781 = vpop.f32.mrf.mxu0
        %v782 = vpop.f32.mrf.mxu0
        %v783 = vadd.f32 %v486, %v782
        %v784 = vpop.f32.mrf.mxu0
        %785 = vmatprep.mubr.bf16.mxu0 0
        %786 = vmatmul.mubr.bf16.gmra.mxu0 %v693
        %v787 = vpop.f32.mrf.mxu0
        %v788 = vadd.f32 %v491, %v787
        %v789 = vpop.f32.mrf.mxu0
        %v790 = vpop.f32.mrf.mxu0
        %v791 = vadd.f32 %v494, %v790
        %v792 = vpop.f32.mrf.mxu0
        %793 = vmatprep.mubr.bf16.mxu0 0
        %794 = vmatmul.mubr.bf16.gmra.mxu0 %v696
        %v795 = vpop.f32.mrf.mxu0
        %v796 = vadd.f32 %v499, %v795
        %v797 = vpop.f32.mrf.mxu0
        %v798 = vpop.f32.mrf.mxu0
        %v799 = vadd.f32 %v502, %v798
        %v800 = vpop.f32.mrf.mxu0
        %801 = vmatprep.mubr.bf16.mxu0 0
        %802 = vmatmul.mubr.bf16.gmra.mxu0 %v699
        %v803 = vpop.f32.mrf.mxu0
        %v804 = vadd.f32 %v507, %v803
        %v805 = vpop.f32.mrf.mxu0
        %v806 = vpop.f32.mrf.mxu0
        %v807 = vadd.f32 %v510, %v806
        %v808 = vpop.f32.mrf.mxu0
        %809 = vmatprep.mubr.bf16.mxu0 0
        %810 = vmatmul.mubr.bf16.gmra.mxu0 %v702
        %v811 = vpop.f32.mrf.mxu0
        %v812 = vadd.f32 %v515, %v811
        %v813 = vpop.f32.mrf.mxu0
        %v814 = vpop.f32.mrf.mxu0
        %v815 = vadd.f32 %v518, %v814
        %v816 = vpop.f32.mrf.mxu0
        %817 = vmatprep.mubr.bf16.mxu0 0
        %818 = vmatmul.mubr.bf16.gmra.mxu0 %v705
        %v819 = vpop.f32.mrf.mxu0
        %v820 = vadd.f32 %v523, %v819
        %v821 = vpop.f32.mrf.mxu0
        %v822 = vpop.f32.mrf.mxu0
        %v823 = vadd.f32 %v526, %v822
        %v824 = vpop.f32.mrf.mxu0
        %825 = vmatprep.mubr.bf16.mxu0 0
        %826 = vmatmul.mubr.bf16.gmra.mxu0 %v708
        %v827 = vpop.f32.mrf.mxu0
        %v828 = vadd.f32 %v531, %v827
        %v829 = vpop.f32.mrf.mxu0
        %v830 = vpop.f32.mrf.mxu0
        %v831 = vadd.f32 %v534, %v830
        %v832 = vpop.f32.mrf.mxu0
        %833 = vmatprep.mubr.bf16.mxu0 0
        %834 = vmatmul.mubr.bf16.gmra.mxu0 %v711
        %v835 = vpop.f32.mrf.mxu0
        %v836 = vadd.f32 %v539, %v835
        %v837 = vpop.f32.mrf.mxu0
        %v838 = vpop.f32.mrf.mxu0
        %v839 = vadd.f32 %v542, %v838
        %v840 = vpop.f32.mrf.mxu0
        %841 = vmatprep.mubr.bf16.mxu0 0
        %842 = vmatmul.mubr.bf16.gmra.mxu0 %v714
        %v843 = vpop.f32.mrf.mxu0
        %v844 = vadd.f32 %v547, %v843
        %v845 = vpop.f32.mrf.mxu0
        %v846 = vpop.f32.mrf.mxu0
        %v847 = vadd.f32 %v550, %v846
        %v848 = vpop.f32.mrf.mxu0
        %849 = vmatprep.mubr.bf16.mxu0 0
        %850 = vmatmul.mubr.bf16.gmra.mxu0 %v717
        %v851 = vpop.f32.mrf.mxu0
        %v852 = vadd.f32 %v555, %v851
        %v853 = vpop.f32.mrf.mxu0
        %v854 = vpop.f32.mrf.mxu0
        %v855 = vadd.f32 %v558, %v854
        %v856 = vpop.f32.mrf.mxu0
        %857 = vmatprep.mubr.bf16.mxu0 0
        %858 = vmatmul.mubr.bf16.gmra.mxu0 %v720
        %v859 = vpop.f32.mrf.mxu0
        %v860 = vadd.f32 %v563, %v859
        %v861 = vpop.f32.mrf.mxu0
        %v862 = vpop.f32.mrf.mxu0
        %v863 = vadd.f32 %v566, %v862
        %v864 = vpop.f32.mrf.mxu0
        %865 = vmatprep.mubr.bf16.mxu0 0
        %866 = vmatmul.mubr.bf16.gmra.mxu0 %v723
        %v867 = vpop.f32.mrf.mxu0
        %v868 = vadd.f32 %v571, %v867
        %v869 = vpop.f32.mrf.mxu0
        %v870 = vpop.f32.mrf.mxu0
        %v871 = vadd.f32 %v574, %v870
        %v872 = vpop.f32.mrf.mxu0
        %873 = vmatprep.mubr.bf16.mxu0 0
        %874 = vmatmul.mubr.bf16.gmra.mxu0 %v726
        %v875 = vpop.f32.mrf.mxu0
        %v876 = vadd.f32 %v579, %v875
        %v877 = vpop.f32.mrf.mxu0
        %v878 = vpop.f32.mrf.mxu0
        %v879 = vadd.f32 %v582, %v878
        %v880 = vpop.f32.mrf.mxu0
        %881 = vmatprep.mubr.bf16.mxu0 0
        %882 = vmatmul.mubr.bf16.gmra.mxu0 %v729
        %v883 = vpop.f32.mrf.mxu0
        %v884 = vadd.f32 %v587, %v883
        %v885 = vpop.f32.mrf.mxu0
        %v886 = vpop.f32.mrf.mxu0
        %v887 = vadd.f32 %v590, %v886
        %v888 = vpop.f32.mrf.mxu0
        %889 = vmatprep.mubr.bf16.mxu0 0
        %890 = vmatmul.mubr.bf16.gmra.mxu0 %v732
        %v891 = vpop.f32.mrf.mxu0
        %v892 = vadd.f32 %v595, %v891
        %v893 = vpop.f32.mrf.mxu0
        %v894 = vpop.f32.mrf.mxu0
        %v895 = vadd.f32 %v598, %v894
        %v896 = vpop.f32.mrf.mxu0
        %897 = vdwg.mxu0
        %s898 = sadd.s32 %s225, 2
        %s899 = smul.u32 %s898, 2
        %s900 = smul.addr %s899, 4
        %s901 = scalar_lea.vmem %s215, %s900
        %v902 = vld [vmem:[%s901] sm:$0xf]
        %v903 = vld [vmem:[%s901 + $0x4] sm:$0xf]
        %v904 = vld [vmem:[%s901 + $0x8] sm:$0xf]
        %v905 = vld [vmem:[%s901 + $0xc] sm:$0xf]
        %v906 = vld [vmem:[%s901 + $0x10] sm:$0xf]
        %v907 = vld [vmem:[%s901 + $0x14] sm:$0xf]
        %v908 = vld [vmem:[%s901 + $0x18] sm:$0xf]
        %v909 = vld [vmem:[%s901 + $0x1c] sm:$0xf]
        %v910 = vld [vmem:[%s901 + $0x20] sm:$0xf]
        %v911 = vld [vmem:[%s901 + $0x24] sm:$0xf]
        %v912 = vld [vmem:[%s901 + $0x28] sm:$0xf]
        %v913 = vld [vmem:[%s901 + $0x2c] sm:$0xf]
        %v914 = vld [vmem:[%s901 + $0x30] sm:$0xf]
        %v915 = vld [vmem:[%s901 + $0x34] sm:$0xf]
        %v916 = vld [vmem:[%s901 + $0x38] sm:$0xf]
        %v917 = vld [vmem:[%s901 + $0x3c] sm:$0xf]
        %v918 = vld [vmem:[%s901 + $0x40] sm:$0xf]
        %v919 = vld [vmem:[%s901 + $0x44] sm:$0xf]
        %v920 = vld [vmem:[%s901 + $0x48] sm:$0xf]
        %v921 = vld [vmem:[%s901 + $0x4c] sm:$0xf]
        %v922 = vld [vmem:[%s901 + $0x50] sm:$0xf]
        %v923 = vld [vmem:[%s901 + $0x54] sm:$0xf]
        %v924 = vld [vmem:[%s901 + $0x58] sm:$0xf]
        %v925 = vld [vmem:[%s901 + $0x5c] sm:$0xf]
        %v926 = vld [vmem:[%s901 + $0x60] sm:$0xf]
        %v927 = vld [vmem:[%s901 + $0x64] sm:$0xf]
        %v928 = vld [vmem:[%s901 + $0x68] sm:$0xf]
        %v929 = vld [vmem:[%s901 + $0x6c] sm:$0xf]
        %v930 = vld [vmem:[%s901 + $0x70] sm:$0xf]
        %v931 = vld [vmem:[%s901 + $0x74] sm:$0xf]
        %v932 = vld [vmem:[%s901 + $0x78] sm:$0xf]
        %v933 = vld [vmem:[%s901 + $0x7c] sm:$0xf]
        %s934 = scalar_lea.vmem %s219, 16
        %v935 = vld [vmem:[%s934] sm:$0xf]
        %v936 = vld [vmem:[%s934 + $0x4] sm:$0x3]
        %v969 = vunpack.c.l.b16 %v902
        %v970 = vunpack.c.l.b16 %v903
        %v971 = vunpack.c.l.b16 %v904
        %v972 = vunpack.c.l.b16 %v905
        %v973 = vunpack.c.l.b16 %v906
        %v974 = vunpack.c.l.b16 %v907
        %v975 = vunpack.c.l.b16 %v908
        %v976 = vunpack.c.l.b16 %v909
        %v977 = vunpack.c.l.b16 %v910
        %v978 = vunpack.c.l.b16 %v911
        %v979 = vunpack.c.l.b16 %v912
        %v980 = vunpack.c.l.b16 %v913
        %v981 = vunpack.c.l.b16 %v914
        %v982 = vunpack.c.l.b16 %v915
        %v983 = vunpack.c.l.b16 %v916
        %v984 = vunpack.c.l.b16 %v917
        %v985 = vunpack.c.l.b16 %v918
        %v986 = vunpack.c.l.b16 %v919
        %v987 = vunpack.c.l.b16 %v920
        %v988 = vunpack.c.l.b16 %v921
        %v989 = vunpack.c.l.b16 %v922
        %v990 = vunpack.c.l.b16 %v923
        %v991 = vunpack.c.l.b16 %v924
        %v992 = vunpack.c.l.b16 %v925
        %v993 = vunpack.c.l.b16 %v926
        %v994 = vunpack.c.l.b16 %v927
        %v995 = vunpack.c.l.b16 %v928
        %v996 = vunpack.c.l.b16 %v929
        %v997 = vunpack.c.l.b16 %v930
        %v998 = vunpack.c.l.b16 %v931
        %v999 = vunpack.c.l.b16 %v932
        %v1000 = vunpack.c.l.b16 %v933
        %v1001 = vpack.c.b16 %v970, %v969
        %v1002 = vpack.c.b16 %v972, %v971
        %v1003 = vpack.c.b16 %v974, %v973
        %v1004 = vpack.c.b16 %v976, %v975
        %v1005 = vpack.c.b16 %v978, %v977
        %v1006 = vpack.c.b16 %v980, %v979
        %v1007 = vpack.c.b16 %v982, %v981
        %v1008 = vpack.c.b16 %v984, %v983
        %v1009 = vpack.c.b16 %v986, %v985
        %v1010 = vpack.c.b16 %v988, %v987
        %v1011 = vpack.c.b16 %v990, %v989
        %v1012 = vpack.c.b16 %v992, %v991
        %v1013 = vpack.c.b16 %v994, %v993
        %v1014 = vpack.c.b16 %v996, %v995
        %v1015 = vpack.c.b16 %v998, %v997
        %v1016 = vpack.c.b16 %v1000, %v999
        %v1019 = vunpack.c.l.b16 %v935
        %v1020 = vunpack.c.l.b16 %v936
        %v1021 = vpack.c.b16 %v1020, %v1019
        %v1023 = vsel %vm387, %v1001, 0
        %v1026 = vsel %vm387, %v1002, 0
        %v1029 = vsel %vm387, %v1003, 0
        %v1032 = vsel %vm387, %v1004, 0
        %v1035 = vsel %vm387, %v1005, 0
        %v1038 = vsel %vm387, %v1006, 0
        %v1041 = vsel %vm387, %v1007, 0
        %v1044 = vsel %vm387, %v1008, 0
        %v1047 = vsel %vm387, %v1009, 0
        %v1050 = vsel %vm387, %v1010, 0
        %v1053 = vsel %vm387, %v1011, 0
        %v1056 = vsel %vm387, %v1012, 0
        %v1059 = vsel %vm387, %v1013, 0
        %v1062 = vsel %vm387, %v1014, 0
        %v1065 = vsel %vm387, %v1015, 0
        %v1068 = vsel %vm387, %v1016, 0
        %v1071 = vsel %vm436, %v1021, 0
        %1073 = vmatprep.subr.bf16.mxu0 0
        %1074 = vmatpush1.bf16.msra.mxu0 0
        %1075 = vmatprep.subr.bf16.mxu0 0
        %1076 = vmatpush1.bf16.msra.mxu0 0
        %1077 = vmatprep.subr.bf16.mxu0 0
        %1078 = vmatpush1.bf16.msra.mxu0 0
        %1079 = vmatprep.subr.bf16.mxu0 0
        %1080 = vmatpush1.bf16.msra.mxu0 0
        %1081 = vmatprep.subr.bf16.mxu0 0
        %1082 = vmatpush1.bf16.msra.mxu0 0
        %1083 = vmatprep.subr.bf16.mxu0 0
        %1084 = vmatpush1.bf16.msra.mxu0 0
        %1085 = vmatprep.subr.bf16.mxu0 0
        %1086 = vmatpush1.bf16.msra.mxu0 0
        %1087 = vmatprep.subr.bf16.mxu0 0
        %1088 = vmatpush1.bf16.msra.mxu0 %v1071
        %1089 = vmatprep.subr.bf16.mxu0 0
        %1090 = vmatpush2.bf16.msra.mxu0 0
        %1091 = vmatprep.subr.bf16.mxu0 0
        %1092 = vmatpush2.bf16.msra.mxu0 0
        %1093 = vmatprep.subr.bf16.mxu0 0
        %1094 = vmatpush2.bf16.msra.mxu0 0
        %1095 = vmatprep.subr.bf16.mxu0 0
        %1096 = vmatpush2.bf16.msra.mxu0 0
        %1097 = vmatprep.subr.bf16.mxu0 0
        %1098 = vmatpush2.bf16.msra.mxu0 0
        %1099 = vmatprep.subr.bf16.mxu0 0
        %1100 = vmatpush2.bf16.msra.mxu0 0
        %1101 = vmatprep.subr.bf16.mxu0 0
        %1102 = vmatpush2.bf16.msra.mxu0 0
        %1103 = vmatprep.subr.bf16.mxu0 0
        %1104 = vmatpush2.bf16.msra.mxu0 0
        %1105 = vmatprep.mubr.bf16.mxu0 0
        %1106 = vmatmul.mubr.bf16.gmra.mxu0 %v1023
        %v1107 = vpop.f32.mrf.mxu0
        %v1108 = vadd.f32 0.0, %v1107
        %v1109 = vpop.f32.mrf.mxu0
        %v1110 = vpop.f32.mrf.mxu0
        %v1111 = vadd.f32 0.0, %v1110
        %v1112 = vpop.f32.mrf.mxu0
        %1113 = vmatprep.mubr.bf16.mxu0 0
        %1114 = vmatmul.mubr.bf16.gmra.mxu0 %v1026
        %v1115 = vpop.f32.mrf.mxu0
        %v1116 = vadd.f32 0.0, %v1115
        %v1117 = vpop.f32.mrf.mxu0
        %v1118 = vpop.f32.mrf.mxu0
        %v1119 = vadd.f32 0.0, %v1118
        %v1120 = vpop.f32.mrf.mxu0
        %1121 = vmatprep.mubr.bf16.mxu0 0
        %1122 = vmatmul.mubr.bf16.gmra.mxu0 %v1029
        %v1123 = vpop.f32.mrf.mxu0
        %v1124 = vadd.f32 0.0, %v1123
        %v1125 = vpop.f32.mrf.mxu0
        %v1126 = vpop.f32.mrf.mxu0
        %v1127 = vadd.f32 0.0, %v1126
        %v1128 = vpop.f32.mrf.mxu0
        %1129 = vmatprep.mubr.bf16.mxu0 0
        %1130 = vmatmul.mubr.bf16.gmra.mxu0 %v1032
        %v1131 = vpop.f32.mrf.mxu0
        %v1132 = vadd.f32 0.0, %v1131
        %v1133 = vpop.f32.mrf.mxu0
        %v1134 = vpop.f32.mrf.mxu0
        %v1135 = vadd.f32 0.0, %v1134
        %v1136 = vpop.f32.mrf.mxu0
        %1137 = vmatprep.mubr.bf16.mxu0 0
        %1138 = vmatmul.mubr.bf16.gmra.mxu0 %v1035
        %v1139 = vpop.f32.mrf.mxu0
        %v1140 = vadd.f32 0.0, %v1139
        %v1141 = vpop.f32.mrf.mxu0
        %v1142 = vpop.f32.mrf.mxu0
        %v1143 = vadd.f32 0.0, %v1142
        %v1144 = vpop.f32.mrf.mxu0
        %1145 = vmatprep.mubr.bf16.mxu0 0
        %1146 = vmatmul.mubr.bf16.gmra.mxu0 %v1038
        %v1147 = vpop.f32.mrf.mxu0
        %v1148 = vadd.f32 0.0, %v1147
        %v1149 = vpop.f32.mrf.mxu0
        %v1150 = vpop.f32.mrf.mxu0
        %v1151 = vadd.f32 0.0, %v1150
        %v1152 = vpop.f32.mrf.mxu0
        %1153 = vmatprep.mubr.bf16.mxu0 0
        %1154 = vmatmul.mubr.bf16.gmra.mxu0 %v1041
        %v1155 = vpop.f32.mrf.mxu0
        %v1156 = vadd.f32 0.0, %v1155
        %v1157 = vpop.f32.mrf.mxu0
        %v1158 = vpop.f32.mrf.mxu0
        %v1159 = vadd.f32 0.0, %v1158
        %v1160 = vpop.f32.mrf.mxu0
        %1161 = vmatprep.mubr.bf16.mxu0 0
        %1162 = vmatmul.mubr.bf16.gmra.mxu0 %v1044
        %v1163 = vpop.f32.mrf.mxu0
        %v1164 = vadd.f32 0.0, %v1163
        %v1165 = vpop.f32.mrf.mxu0
        %v1166 = vpop.f32.mrf.mxu0
        %v1167 = vadd.f32 0.0, %v1166
        %v1168 = vpop.f32.mrf.mxu0
        %1169 = vmatprep.mubr.bf16.mxu0 0
        %1170 = vmatmul.mubr.bf16.gmra.mxu0 %v1047
        %v1171 = vpop.f32.mrf.mxu0
        %v1172 = vadd.f32 0.0, %v1171
        %v1173 = vpop.f32.mrf.mxu0
        %v1174 = vpop.f32.mrf.mxu0
        %v1175 = vadd.f32 0.0, %v1174
        %v1176 = vpop.f32.mrf.mxu0
        %1177 = vmatprep.mubr.bf16.mxu0 0
        %1178 = vmatmul.mubr.bf16.gmra.mxu0 %v1050
        %v1179 = vpop.f32.mrf.mxu0
        %v1180 = vadd.f32 0.0, %v1179
        %v1181 = vpop.f32.mrf.mxu0
        %v1182 = vpop.f32.mrf.mxu0
        %v1183 = vadd.f32 0.0, %v1182
        %v1184 = vpop.f32.mrf.mxu0
        %1185 = vmatprep.mubr.bf16.mxu0 0
        %1186 = vmatmul.mubr.bf16.gmra.mxu0 %v1053
        %v1187 = vpop.f32.mrf.mxu0
        %v1188 = vadd.f32 0.0, %v1187
        %v1189 = vpop.f32.mrf.mxu0
        %v1190 = vpop.f32.mrf.mxu0
        %v1191 = vadd.f32 0.0, %v1190
        %v1192 = vpop.f32.mrf.mxu0
        %1193 = vmatprep.mubr.bf16.mxu0 0
        %1194 = vmatmul.mubr.bf16.gmra.mxu0 %v1056
        %v1195 = vpop.f32.mrf.mxu0
        %v1196 = vadd.f32 0.0, %v1195
        %v1197 = vpop.f32.mrf.mxu0
        %v1198 = vpop.f32.mrf.mxu0
        %v1199 = vadd.f32 0.0, %v1198
        %v1200 = vpop.f32.mrf.mxu0
        %1201 = vmatprep.mubr.bf16.mxu0 0
        %1202 = vmatmul.mubr.bf16.gmra.mxu0 %v1059
        %v1203 = vpop.f32.mrf.mxu0
        %v1204 = vadd.f32 0.0, %v1203
        %v1205 = vpop.f32.mrf.mxu0
        %v1206 = vpop.f32.mrf.mxu0
        %v1207 = vadd.f32 0.0, %v1206
        %v1208 = vpop.f32.mrf.mxu0
        %1209 = vmatprep.mubr.bf16.mxu0 0
        %1210 = vmatmul.mubr.bf16.gmra.mxu0 %v1062
        %v1211 = vpop.f32.mrf.mxu0
        %v1212 = vadd.f32 0.0, %v1211
        %v1213 = vpop.f32.mrf.mxu0
        %v1214 = vpop.f32.mrf.mxu0
        %v1215 = vadd.f32 0.0, %v1214
        %v1216 = vpop.f32.mrf.mxu0
        %1217 = vmatprep.mubr.bf16.mxu0 0
        %1218 = vmatmul.mubr.bf16.gmra.mxu0 %v1065
        %v1219 = vpop.f32.mrf.mxu0
        %v1220 = vadd.f32 0.0, %v1219
        %v1221 = vpop.f32.mrf.mxu0
        %v1222 = vpop.f32.mrf.mxu0
        %v1223 = vadd.f32 0.0, %v1222
        %v1224 = vpop.f32.mrf.mxu0
        %1225 = vmatprep.mubr.bf16.mxu0 0
        %1226 = vmatmul.mubr.bf16.gmra.mxu0 %v1068
        %v1227 = vpop.f32.mrf.mxu0
        %v1228 = vadd.f32 0.0, %v1227
        %v1229 = vpop.f32.mrf.mxu0
        %v1230 = vpop.f32.mrf.mxu0
        %v1231 = vadd.f32 0.0, %v1230
        %v1232 = vpop.f32.mrf.mxu0
        %1233 = vdwg.mxu0
        %v1234 = vadd.f32 %v772, %v1108
        %v1235 = vadd.f32 %v775, %v1111
        %v1236 = vadd.f32 %v780, %v1116
        %v1237 = vadd.f32 %v783, %v1119
        %v1238 = vadd.f32 %v788, %v1124
        %v1239 = vadd.f32 %v791, %v1127
        %v1240 = vadd.f32 %v796, %v1132
        %v1241 = vadd.f32 %v799, %v1135
        %v1242 = vadd.f32 %v804, %v1140
        %v1243 = vadd.f32 %v807, %v1143
        %v1244 = vadd.f32 %v812, %v1148
        %v1245 = vadd.f32 %v815, %v1151
        %v1246 = vadd.f32 %v820, %v1156
        %v1247 = vadd.f32 %v823, %v1159
        %v1248 = vadd.f32 %v828, %v1164
        %v1249 = vadd.f32 %v831, %v1167
        %v1250 = vadd.f32 %v836, %v1172
        %v1251 = vadd.f32 %v839, %v1175
        %v1252 = vadd.f32 %v844, %v1180
        %v1253 = vadd.f32 %v847, %v1183
        %v1254 = vadd.f32 %v852, %v1188
        %v1255 = vadd.f32 %v855, %v1191
        %v1256 = vadd.f32 %v860, %v1196
        %v1257 = vadd.f32 %v863, %v1199
        %v1258 = vadd.f32 %v868, %v1204
        %v1259 = vadd.f32 %v871, %v1207
        %v1260 = vadd.f32 %v876, %v1212
        %v1261 = vadd.f32 %v879, %v1215
        %v1262 = vadd.f32 %v884, %v1220
        %v1263 = vadd.f32 %v887, %v1223
        %v1264 = vadd.f32 %v892, %v1228
        %v1265 = vadd.f32 %v895, %v1231
        %v1266 = vld [vmem:[%s222] sm:$0x1]
        %v1268 = vlaneseq
        %v1269 = vshrl.u32 %v1268, 7
        %v1270 = vsub.s32 0, %v1269
        %v1271 = vrot.slane %v1266, %v1270
        %v1273 = vadd.f32 %v1234, %v1271
        %v1274 = vadd.f32 %v1235, %v1271
        %v1275 = vadd.f32 %v1236, %v1271
        %v1276 = vadd.f32 %v1237, %v1271
        %v1277 = vadd.f32 %v1238, %v1271
        %v1278 = vadd.f32 %v1239, %v1271
        %v1279 = vadd.f32 %v1240, %v1271
        %v1280 = vadd.f32 %v1241, %v1271
        %v1281 = vadd.f32 %v1242, %v1271
        %v1282 = vadd.f32 %v1243, %v1271
        %v1283 = vadd.f32 %v1244, %v1271
        %v1284 = vadd.f32 %v1245, %v1271
        %v1285 = vadd.f32 %v1246, %v1271
        %v1286 = vadd.f32 %v1247, %v1271
        %v1287 = vadd.f32 %v1248, %v1271
        %v1288 = vadd.f32 %v1249, %v1271
        %v1289 = vadd.f32 %v1250, %v1271
        %v1290 = vadd.f32 %v1251, %v1271
        %v1291 = vadd.f32 %v1252, %v1271
        %v1292 = vadd.f32 %v1253, %v1271
        %v1293 = vadd.f32 %v1254, %v1271
        %v1294 = vadd.f32 %v1255, %v1271
        %v1295 = vadd.f32 %v1256, %v1271
        %v1296 = vadd.f32 %v1257, %v1271
        %v1297 = vadd.f32 %v1258, %v1271
        %v1298 = vadd.f32 %v1259, %v1271
        %v1299 = vadd.f32 %v1260, %v1271
        %v1300 = vadd.f32 %v1261, %v1271
        %v1301 = vadd.f32 %v1262, %v1271
        %v1302 = vadd.f32 %v1263, %v1271
        %v1303 = vadd.f32 %v1264, %v1271
        %v1304 = vadd.f32 %v1265, %v1271
        %v1305 = vmax.f32 %v1273, 0.0
        %v1306 = vmax.f32 %v1274, 0.0
        %v1307 = vmax.f32 %v1275, 0.0
        %v1308 = vmax.f32 %v1276, 0.0
        %v1309 = vmax.f32 %v1277, 0.0
        %v1310 = vmax.f32 %v1278, 0.0
        %v1311 = vmax.f32 %v1279, 0.0
        %v1312 = vmax.f32 %v1280, 0.0
        %v1313 = vmax.f32 %v1281, 0.0
        %v1314 = vmax.f32 %v1282, 0.0
        %v1315 = vmax.f32 %v1283, 0.0
        %v1316 = vmax.f32 %v1284, 0.0
        %v1317 = vmax.f32 %v1285, 0.0
        %v1318 = vmax.f32 %v1286, 0.0
        %v1319 = vmax.f32 %v1287, 0.0
        %v1320 = vmax.f32 %v1288, 0.0
        %v1321 = vmax.f32 %v1289, 0.0
        %v1322 = vmax.f32 %v1290, 0.0
        %v1323 = vmax.f32 %v1291, 0.0
        %v1324 = vmax.f32 %v1292, 0.0
        %v1325 = vmax.f32 %v1293, 0.0
        %v1326 = vmax.f32 %v1294, 0.0
        %v1327 = vmax.f32 %v1295, 0.0
        %v1328 = vmax.f32 %v1296, 0.0
        %v1329 = vmax.f32 %v1297, 0.0
        %v1330 = vmax.f32 %v1298, 0.0
        %v1331 = vmax.f32 %v1299, 0.0
        %v1332 = vmax.f32 %v1300, 0.0
        %v1333 = vmax.f32 %v1301, 0.0
        %v1334 = vmax.f32 %v1302, 0.0
        %v1335 = vmax.f32 %v1303, 0.0
        %v1336 = vmax.f32 %v1304, 0.0
        %v1337 = vpack.c.bf16 %v1306, %v1305
        %v1338 = vpack.c.bf16 %v1308, %v1307
        %v1339 = vpack.c.bf16 %v1310, %v1309
        %v1340 = vpack.c.bf16 %v1312, %v1311
        %v1341 = vpack.c.bf16 %v1314, %v1313
        %v1342 = vpack.c.bf16 %v1316, %v1315
        %v1343 = vpack.c.bf16 %v1318, %v1317
        %v1344 = vpack.c.bf16 %v1320, %v1319
        %v1345 = vpack.c.bf16 %v1322, %v1321
        %v1346 = vpack.c.bf16 %v1324, %v1323
        %v1347 = vpack.c.bf16 %v1326, %v1325
        %v1348 = vpack.c.bf16 %v1328, %v1327
        %v1349 = vpack.c.bf16 %v1330, %v1329
        %v1350 = vpack.c.bf16 %v1332, %v1331
        %v1351 = vpack.c.bf16 %v1334, %v1333
        %v1352 = vpack.c.bf16 %v1336, %v1335
        %v1369 = vunpack.c.l.b16 %v1337
        %v1370 = vunpack.c.h.b16 %v1337
        %v1371 = vunpack.c.l.b16 %v1338
        %v1372 = vunpack.c.h.b16 %v1338
        %v1373 = vunpack.c.l.b16 %v1339
        %v1374 = vunpack.c.h.b16 %v1339
        %v1375 = vunpack.c.l.b16 %v1340
        %v1376 = vunpack.c.h.b16 %v1340
        %v1377 = vunpack.c.l.b16 %v1341
        %v1378 = vunpack.c.h.b16 %v1341
        %v1379 = vunpack.c.l.b16 %v1342
        %v1380 = vunpack.c.h.b16 %v1342
        %v1381 = vunpack.c.l.b16 %v1343
        %v1382 = vunpack.c.h.b16 %v1343
        %v1383 = vunpack.c.l.b16 %v1344
        %v1384 = vunpack.c.h.b16 %v1344
        %v1385 = vunpack.c.l.b16 %v1345
        %v1386 = vunpack.c.h.b16 %v1345
        %v1387 = vunpack.c.l.b16 %v1346
        %v1388 = vunpack.c.h.b16 %v1346
        %v1389 = vunpack.c.l.b16 %v1347
        %v1390 = vunpack.c.h.b16 %v1347
        %v1391 = vunpack.c.l.b16 %v1348
        %v1392 = vunpack.c.h.b16 %v1348
        %v1393 = vunpack.c.l.b16 %v1349
        %v1394 = vunpack.c.h.b16 %v1349
        %v1395 = vunpack.c.l.b16 %v1350
        %v1396 = vunpack.c.h.b16 %v1350
        %v1397 = vunpack.c.l.b16 %v1351
        %v1398 = vunpack.c.h.b16 %v1351
        %v1399 = vunpack.c.l.b16 %v1352
        %v1400 = vunpack.c.h.b16 %v1352
        %v1401 = vpack.c.b16 %v1369, %v1369
        %v1402 = vpack.c.b16 %v1370, %v1370
        %v1403 = vpack.c.b16 %v1371, %v1371
        %v1404 = vpack.c.b16 %v1372, %v1372
        %v1405 = vpack.c.b16 %v1373, %v1373
        %v1406 = vpack.c.b16 %v1374, %v1374
        %v1407 = vpack.c.b16 %v1375, %v1375
        %v1408 = vpack.c.b16 %v1376, %v1376
        %v1409 = vpack.c.b16 %v1377, %v1377
        %v1410 = vpack.c.b16 %v1378, %v1378
        %v1411 = vpack.c.b16 %v1379, %v1379
        %v1412 = vpack.c.b16 %v1380, %v1380
        %v1413 = vpack.c.b16 %v1381, %v1381
        %v1414 = vpack.c.b16 %v1382, %v1382
        %v1415 = vpack.c.b16 %v1383, %v1383
        %v1416 = vpack.c.b16 %v1384, %v1384
        %v1417 = vpack.c.b16 %v1385, %v1385
        %v1418 = vpack.c.b16 %v1386, %v1386
        %v1419 = vpack.c.b16 %v1387, %v1387
        %v1420 = vpack.c.b16 %v1388, %v1388
        %v1421 = vpack.c.b16 %v1389, %v1389
        %v1422 = vpack.c.b16 %v1390, %v1390
        %v1423 = vpack.c.b16 %v1391, %v1391
        %v1424 = vpack.c.b16 %v1392, %v1392
        %v1425 = vpack.c.b16 %v1393, %v1393
        %v1426 = vpack.c.b16 %v1394, %v1394
        %v1427 = vpack.c.b16 %v1395, %v1395
        %v1428 = vpack.c.b16 %v1396, %v1396
        %v1429 = vpack.c.b16 %v1397, %v1397
        %v1430 = vpack.c.b16 %v1398, %v1398
        %v1431 = vpack.c.b16 %v1399, %v1399
        %v1432 = vpack.c.b16 %v1400, %v1400
        %1465 = vst [vmem:[%s210] sm:$0xf] %v1401
        %1466 = vst [vmem:[%s210 + $0x4] sm:$0xf] %v1402
        %1467 = vst [vmem:[%s210 + $0x8] sm:$0xf] %v1403
        %1468 = vst [vmem:[%s210 + $0xc] sm:$0xf] %v1404
        %1469 = vst [vmem:[%s210 + $0x10] sm:$0xf] %v1405
        %1470 = vst [vmem:[%s210 + $0x14] sm:$0xf] %v1406
        %1471 = vst [vmem:[%s210 + $0x18] sm:$0xf] %v1407
        %1472 = vst [vmem:[%s210 + $0x1c] sm:$0xf] %v1408
        %1473 = vst [vmem:[%s210 + $0x20] sm:$0xf] %v1409
        %1474 = vst [vmem:[%s210 + $0x24] sm:$0xf] %v1410
        %1475 = vst [vmem:[%s210 + $0x28] sm:$0xf] %v1411
        %1476 = vst [vmem:[%s210 + $0x2c] sm:$0xf] %v1412
        %1477 = vst [vmem:[%s210 + $0x30] sm:$0xf] %v1413
        %1478 = vst [vmem:[%s210 + $0x34] sm:$0xf] %v1414
        %1479 = vst [vmem:[%s210 + $0x38] sm:$0xf] %v1415
        %1480 = vst [vmem:[%s210 + $0x3c] sm:$0xf] %v1416
        %1481 = vst [vmem:[%s210 + $0x40] sm:$0xf] %v1417
        %1482 = vst [vmem:[%s210 + $0x44] sm:$0xf] %v1418
        %1483 = vst [vmem:[%s210 + $0x48] sm:$0xf] %v1419
        %1484 = vst [vmem:[%s210 + $0x4c] sm:$0xf] %v1420
        %1485 = vst [vmem:[%s210 + $0x50] sm:$0xf] %v1421
        %1486 = vst [vmem:[%s210 + $0x54] sm:$0xf] %v1422
        %1487 = vst [vmem:[%s210 + $0x58] sm:$0xf] %v1423
        %1488 = vst [vmem:[%s210 + $0x5c] sm:$0xf] %v1424
        %1489 = vst [vmem:[%s210 + $0x60] sm:$0xf] %v1425
        %1490 = vst [vmem:[%s210 + $0x64] sm:$0xf] %v1426
        %1491 = vst [vmem:[%s210 + $0x68] sm:$0xf] %v1427
        %1492 = vst [vmem:[%s210 + $0x6c] sm:$0xf] %v1428
        %1493 = vst [vmem:[%s210 + $0x70] sm:$0xf] %v1429
        %1494 = vst [vmem:[%s210 + $0x74] sm:$0xf] %v1430
        %1495 = vst [vmem:[%s210 + $0x78] sm:$0xf] %v1431
        %1496 = vst [vmem:[%s210 + $0x7c] sm:$0xf] %v1432
        %s1497 = sand.u32 %s126, 1
        %s1498 = scalar_lea.sflag [#allocation3], %s1497
        %s1499 = sand.u32 %s126, 1
        %s1500 = smul.addr %s1499, 128
        %s1501 = scalar_lea.vmem [#allocation2], %s1500
        // Predicated region
        $region33: #{tpu_custom_call.1} parent=31 // pred_check
          %p1502 = pneg %p136
        $region34: #{tpu_custom_call.1} parent=31 // pred_check_branch
          %1504 = sbr.rel (%p1502) target = $region36
        $region35: #{tpu_custom_call.1} parent=31 // pred_region
          %s1505 = smul.u32 32, %s24
          %s1507 = ssub.s32 2048, 2048
          %1508 = vsyncadd %s1498, %s1507
          %s1509 = sadd.s32 %s23, %s1505
          %s1510 = smul.addr %s22, 32
          %s1511 = sadd.s32 %s1509, %s1510
          %s1512 = smul.addr %s1511, 64
          %s1513 = scalar_lea.hbm %s3, %s1512
          %s1514 = sshll.u32 %s1501, 4
          %s1515 = int_to_ptr.vmem [resolvable:$true] %s1514
          %1520 = dma.vmem_to_hbm [thread:$0]  %s1515, 2048, %s1513, %s1498, 64, 64, 4
        $region36: #{tpu_custom_call.1} parent=31 // pred_fallthru
          _
      $region32: #{tpu_custom_call.1} parent=5 // pred_fallthru
        _
      %p1521 = scmp.le.s32.totalorder 2, %s12
      // Predicated region
      $region37: #{tpu_custom_call.1} parent=5 // pred_check
        %p1522 = pneg %p1521
      $region38: #{tpu_custom_call.1} parent=5 // pred_check_branch
        %1524 = sbr.rel (%p1522) target = $region40
      $region39: #{tpu_custom_call.1} parent=5 // pred_region
        %s1525 = ssub.s32 %s12, 2
        // Predicated region
        $region41: #{tpu_custom_call.1} parent=39 // pred_check
          %p1526 = pneg %p142
        $region42: #{tpu_custom_call.1} parent=39 // pred_check_branch
          %1528 = sbr.rel (%p1526) target = $region44
        $region43: #{tpu_custom_call.1} parent=39 // pred_region
          %s1529 = sand.u32 %s127, 1
          %s1530 = scalar_lea.sflag [#allocation3], %s1529
          %s1531 = sand.u32 %s127, 1
          %s1532 = smul.addr %s1531, 128
          %s1533 = scalar_lea.vmem [#allocation2], %s1532
          %1534 = dma.done %s1530, 2048
        $region44: #{tpu_custom_call.1} parent=39 // pred_fallthru
          _
      $region40: #{tpu_custom_call.1} parent=5 // pred_fallthru
        _
    $region6: #{tpu_custom_call.1} parent=1 // loop_footer
      %s16 = sadd.s32 1, %s12
    $region7: #{tpu_custom_call.1} parent=1 // loop_footer_branch
      %11 = sbr.rel target = $region3
    $region8: #{tpu_custom_call.1} parent=1 // loop_exit
      _
    %1535 = vsyncpa [#allocation3], 1
    %s1536 = scalar_lea.sflag [#allocation3], 1
    %1537 = vsyncpa %s1536, 1

</llo_original>
